<compile_context>
chip_gen: v7x
topology: tpu7x:2x2x1
jax: 0.10.0
libtpu: 0.0.40
codegen_flags: <defaults>
</compile_context>

<pallas_src>
import functools

import jax
import jax.numpy as jnp
from jax.experimental import pallas as pl
from jax.experimental.pallas import tpu as pltpu


def _round_up(x, m):
    return (x + m - 1) // m * m


# ----------------------------- kernel (one SAGE layer) -----------------------------

def sage_layer_kernel(a_ref, xall_ref, w_ref, b_ref, o_ref, *, tm, apply_relu):
    # a_ref:    (tm, Np)   bf16  mean-aggregation rows for this node tile
    # xall_ref: (Np, Hp)   bf16  all node features (resident across the grid)
    # w_ref:    (2Hp, Hp)  bf16  fused [W_l ; W_r]
    # b_ref:    (1, Hp)    f32   bias
    # o_ref:    (tm, Hp)   bf16 (hidden layer) or f32 (final layer)
    agg = jnp.dot(a_ref[...], xall_ref[...],
                  preferred_element_type=jnp.float32)            # (tm, Hp) f32

    # This tile's own (self/root) features, sliced from the resident full x.
    row_start = pl.multiple_of(pl.program_id(0) * tm, tm)        # tm is a mult. of 8
    xrow = xall_ref[pl.ds(row_start, tm), :]                     # (tm, Hp) bf16

    z = jnp.concatenate([agg.astype(jnp.bfloat16), xrow], axis=-1)   # (tm, 2Hp)
    h = jnp.dot(z, w_ref[...], preferred_element_type=jnp.float32) + b_ref[...]
    if apply_relu:
        h = jnp.maximum(h, 0.0)
    o_ref[...] = h.astype(o_ref.dtype)


def _sage_layer(a, x, w, b, *, apply_relu, out_dtype, row_tile):
    """One row-tiled SAGEConv layer: a (Np,Np) bf16, x (Np,Hp) bf16, w (2Hp,Hp) bf16."""
    Np, Hp = x.shape
    tm = min(row_tile, Np)
    assert Np % tm == 0, (Np, tm)
    grid = (Np // tm,)
    out_itemsize = jnp.dtype(out_dtype).itemsize

    # VMEM budget: double-buffered streamed A tiles + resident x / weights / bias
    # + double-buffered output tiles.
    est = (2 * tm * Np * 2          # A tiles (bf16, double-buffered)
           + Np * Hp * 2            # full x (resident)
           + 2 * Hp * Hp * 2        # fused weights (resident)
           + Hp * 4                 # bias
           + 2 * tm * Hp * out_itemsize)
    vmem_limit = int(min(64 << 20, max(16 << 20, 2 * est)))

    flops = 2 * Np * Np * Hp + 2 * Np * (2 * Hp) * Hp
    bytes_accessed = (Np * Np * 2 + Np * Hp * 2 + 2 * Hp * Hp * 2
                      + Hp * 4 + Np * Hp * out_itemsize)

    kernel = functools.partial(sage_layer_kernel, tm=tm, apply_relu=apply_relu)
    return pl.pallas_call(
        kernel,
        out_shape=jax.ShapeDtypeStruct((Np, Hp), out_dtype),
        grid_spec=pltpu.PrefetchScalarGridSpec(
            num_scalar_prefetch=0,
            grid=grid,
            in_specs=[
                pl.BlockSpec((tm, Np), lambda i: (i, 0)),        # A row tile (streamed)
                pl.BlockSpec((Np, Hp), lambda i: (0, 0)),        # full x (resident)
                pl.BlockSpec((2 * Hp, Hp), lambda i: (0, 0)),    # fused weights
                pl.BlockSpec((1, Hp), lambda i: (0, 0)),         # bias
            ],
            out_specs=pl.BlockSpec((tm, Hp), lambda i: (i, 0)),
        ),
        compiler_params=pltpu.CompilerParams(
            dimension_semantics=("parallel",),
            vmem_limit_bytes=vmem_limit,
        ),
        cost_estimate=pl.CostEstimate(
            flops=int(flops), transcendentals=0, bytes_accessed=int(bytes_accessed)),
    )(a, x, w, b)


# ----------------------------- glue (plain JAX) -----------------------------

def build_mean_adjacency(edge_index, num_nodes):
    """Dense mean-aggregation matrix: A[i, j] = 1/deg_in(i) for edge j->i."""
    src, dst = edge_index[0], edge_index[1]
    adj = jnp.zeros((num_nodes, num_nodes), jnp.float32).at[dst, src].add(1.0)
    deg = jnp.sum(adj, axis=1, keepdims=True)
    return adj / jnp.maximum(deg, 1.0)   # zero-in-degree rows -> all zeros (PyG mean)


def gnn_forward(x, edge_index, params, *, row_tile=256):
    # TODO(synk): for genuinely sparse graphs (E << N^2) a CSR scalar-prefetch
    # gather/segment-sum aggregation would replace this dense O(N^2) A matmul.
    N, H = x.shape
    Hp = _round_up(H, 128)                    # lane-dense hidden dim
    tm = min(row_tile, _round_up(N, 8))       # row tile (multiple of 8)
    Np = _round_up(N, tm)                     # padded node count divisible by tm

    a = build_mean_adjacency(edge_index, N)
    a = jnp.pad(a, ((0, Np - N), (0, Np - N))).astype(jnp.bfloat16)
    xp = jnp.pad(x, ((0, Np - N), (0, Hp - H))).astype(jnp.bfloat16)

    w1l, w1r, b1, w2l, w2r, b2 = params

    def pack_w(wl, wr):
        wl = jnp.pad(wl, ((0, Hp - H), (0, Hp - H)))
        wr = jnp.pad(wr, ((0, Hp - H), (0, Hp - H)))
        return jnp.concatenate([wl, wr], axis=0).astype(jnp.bfloat16)   # (2Hp, Hp)

    w1 = pack_w(w1l, w1r)
    w2 = pack_w(w2l, w2r)
    b1p = jnp.pad(b1, ((0, 0), (0, Hp - H))).astype(jnp.float32)
    b2p = jnp.pad(b2, ((0, 0), (0, Hp - H))).astype(jnp.float32)

    # Layer 1 (ReLU) -> bf16 h1; Layer 2 -> f32 output.
    h1 = _sage_layer(a, xp, w1, b1p, apply_relu=True,
                     out_dtype=jnp.bfloat16, row_tile=tm)
    out = _sage_layer(a, h1, w2, b2p, apply_relu=False,
                      out_dtype=jnp.float32, row_tile=tm)

    # TODO(synk): Dropout is identity in eval mode; training-mode stochastic mask
    # (pltpu.prng_*) intentionally omitted to keep the forward deterministic.
    return out[:N, :H]


# ----------------------------- references -----------------------------

def gnn_reference_f32(x, edge_index, params):
    """Pure-f32 PyTorch-semantics reference."""
    a = build_mean_adjacency(edge_index, x.shape[0])
    w1l, w1r, b1, w2l, w2r, b2 = params
    h1 = jnp.maximum((a @ x) @ w1l + x @ w1r + b1, 0.0)
    return (a @ h1) @ w2l + h1 @ w2r + b2


def gnn_reference_matched(x, edge_index, params):
    """Reference mirroring the kernel's bf16-input / f32-accumulate dtype path."""
    a = build_mean_adjacency(edge_index, x.shape[0]).astype(jnp.bfloat16)
    xb = x.astype(jnp.bfloat16)
    w1l, w1r, b1, w2l, w2r, b2 = params

    def layer(xb, wl, wr, b, relu):
        agg = jnp.dot(a, xb, preferred_element_type=jnp.float32).astype(jnp.bfloat16)
        z = jnp.concatenate([agg, xb], axis=-1)
        w = jnp.concatenate([wl, wr], axis=0).astype(jnp.bfloat16)
        h = jnp.dot(z, w, preferred_element_type=jnp.float32) + b
        return jnp.maximum(h, 0.0) if relu else h

    h1 = layer(xb, w1l, w1r, b1, True).astype(jnp.bfloat16)
    return layer(h1, w2l, w2r, b2, False)


def init_params(key, hidden):
    """Deterministic synthetic init (Kaiming-uniform-ish, matching Linear shapes)."""
    ks = jax.random.split(key, 6)
    s = 1.0 / jnp.sqrt(hidden)
    u = lambda k, shape: jax.random.uniform(k, shape, jnp.float32, -s, s)
    w1l = u(ks[0], (hidden, hidden))    # conv1.lin_l.weight^T  (in, out)
    w1r = u(ks[1], (hidden, hidden))    # conv1.lin_r.weight^T
    b1 = u(ks[2], (1, hidden))          # conv1.lin_l.bias
    w2l = u(ks[3], (hidden, hidden))    # conv2.lin_l.weight^T
    w2r = u(ks[4], (hidden, hidden))    # conv2.lin_r.weight^T
    b2 = u(ks[5], (1, hidden))          # conv2.lin_l.bias
    return (w1l, w1r, b1, w2l, w2r, b2)


if __name__ == "__main__":
    key = jax.random.PRNGKey(0)
    N, H, E = 16, 32, 48          # nodes, hidden_sizes, edges
    dropout_rate = 0.5            # eval mode -> identity

    k_x, k_src, k_dst, k_params = jax.random.split(key, 4)
    x = jax.random.normal(k_x, (N, H), jnp.float32)
    src = jax.random.randint(k_src, (E,), 0, N, dtype=jnp.int32)
    dst = jax.random.randint(k_dst, (E,), 0, N, dtype=jnp.int32)
    edge_index = jnp.stack([src, dst], axis=0)   # (2, E): row0 = source, row1 = target

    params = init_params(k_params, H)

    out = gnn_forward(x, edge_index, params)
    out = jax.block_until_ready(out)

    assert out.shape == (N, H)
    ref_matched = gnn_reference_matched(x, edge_index, params)
    ref_f32 = gnn_reference_f32(x, edge_index, params)
    assert jnp.allclose(out, ref_matched, atol=1e-4, rtol=1e-4), \
        "mismatch vs dtype-matched JAX reference"
    assert jnp.allclose(out, ref_f32, atol=1e-1, rtol=1e-1), \
        "mismatch vs f32 JAX reference beyond bf16 tolerance"

    print("KERNEL_OK")
</pallas_src>

<mosaic_0001>
module attributes {stable_mosaic.version = 11 : i64} {
  func.func @sage_layer_kernel(%arg0: i32, %arg1: memref<16x16xbf16, #tpu.memory_space<vmem>>, %arg2: memref<16x128xbf16, #tpu.memory_space<vmem>>, %arg3: memref<256x128xbf16, #tpu.memory_space<vmem>>, %arg4: memref<1x128xf32, #tpu.memory_space<vmem>>, %arg5: memref<16x128xbf16, #tpu.memory_space<vmem>>) attributes {dimension_semantics = [#tpu.dimension_semantics<parallel>], iteration_bounds = array<i64: 1>, scalar_prefetch = 0 : i64, scratch_operands = 0 : i64, tpu.core_type = #tpu.core_type<tc>, window_params = [{transform_indices = @transform_0, window_bounds = array<i64: 16, 16>}, {pipeline_mode = #tpu.pipeline_mode<synchronous>, transform_indices = @transform_1, window_bounds = array<i64: 16, 128>}, {pipeline_mode = #tpu.pipeline_mode<synchronous>, transform_indices = @transform_2, window_bounds = array<i64: 256, 128>}, {pipeline_mode = #tpu.pipeline_mode<synchronous>, transform_indices = @transform_3, window_bounds = array<i64: 1, 128>}, {transform_indices = @transform_4, window_bounds = array<i64: 16, 128>}]} {
    %c0 = arith.constant 0 : index
    %c0_0 = arith.constant 0 : index
    %0 = vector.load %arg1[%c0, %c0_0] : memref<16x16xbf16, #tpu.memory_space<vmem>>, vector<16x16xbf16>
    %c0_1 = arith.constant 0 : index
    %c0_2 = arith.constant 0 : index
    %1 = vector.load %arg2[%c0_1, %c0_2] : memref<16x128xbf16, #tpu.memory_space<vmem>>, vector<16x128xbf16>
    %cst = arith.constant dense<0.000000e+00> : vector<16x128xf32>
    %2 = tpu.matmul %0, %1, %cst {dimension_numbers = #tpu.dot_dimension_numbers<[1], [0], [0], [1], [0, 0, 1, 1], [], []>} : vector<16x16xbf16>, vector<16x128xbf16>, vector<16x128xf32> -> vector<16x128xf32>
    %c16_i32 = arith.constant 16 : i32
    %3 = arith.muli %arg0, %c16_i32 : i32
    %4 = tpu.assume_multiple %3, 16 : i32
    %5 = arith.index_cast %4 : i32 to index
    %c0_3 = arith.constant 0 : index
    %6 = vector.load %arg2[%5, %c0_3] : memref<16x128xbf16, #tpu.memory_space<vmem>>, vector<16x128xbf16>
    %7 = arith.truncf %2 : vector<16x128xf32> to vector<16x128xbf16>
    %8 = tpu.concatenate %7, %6 in 1 : vector<16x128xbf16>, vector<16x128xbf16> -> vector<16x256xbf16>
    %c0_4 = arith.constant 0 : index
    %c0_5 = arith.constant 0 : index
    %9 = vector.load %arg3[%c0_4, %c0_5] : memref<256x128xbf16, #tpu.memory_space<vmem>>, vector<256x128xbf16>
    %cst_6 = arith.constant dense<0.000000e+00> : vector<16x128xf32>
    %10 = tpu.matmul %8, %9, %cst_6 {dimension_numbers = #tpu.dot_dimension_numbers<[1], [0], [0], [1], [0, 0, 1, 1], [], []>} : vector<16x256xbf16>, vector<256x128xbf16>, vector<16x128xf32> -> vector<16x128xf32>
    %c0_7 = arith.constant 0 : index
    %c0_8 = arith.constant 0 : index
    %11 = vector.load %arg4[%c0_7, %c0_8] : memref<1x128xf32, #tpu.memory_space<vmem>>, vector<1x128xf32>
    %12 = vector.broadcast %11 : vector<1x128xf32> to vector<16x128xf32>
    %13 = arith.addf %10, %12 : vector<16x128xf32>
    %cst_9 = arith.constant 0.000000e+00 : f32
    %14 = vector.broadcast %cst_9 : f32 to vector<16x128xf32>
    %15 = arith.maximumf %13, %14 : vector<16x128xf32>
    %16 = arith.truncf %15 : vector<16x128xf32> to vector<16x128xbf16>
    %c0_10 = arith.constant 0 : index
    %c0_11 = arith.constant 0 : index
    %17 = vector.load %arg5[%c0_10, %c0_11] : memref<16x128xbf16, #tpu.memory_space<vmem>>, vector<16x128xbf16>
    tpu.vector_store %arg5[%c0_10, %c0_11], %16 {strides = array<i32>} : memref<16x128xbf16, #tpu.memory_space<vmem>>, vector<16x128xbf16>,
    return
  }
  func.func @transform_0(%arg0: i32) -> (i32, i32) {
    %c0_i32 = arith.constant 0 : i32
    %c0_i32_0 = arith.constant 0 : i32
    return %arg0, %c0_i32 : i32, i32
  }
  func.func @transform_1(%arg0: i32) -> (i32, i32) {
    %c0_i32 = arith.constant 0 : i32
    %c0_i32_0 = arith.constant 0 : i32
    %c0_i32_1 = arith.constant 0 : i32
    return %c0_i32, %c0_i32_0 : i32, i32
  }
  func.func @transform_2(%arg0: i32) -> (i32, i32) {
    %c0_i32 = arith.constant 0 : i32
    %c0_i32_0 = arith.constant 0 : i32
    %c0_i32_1 = arith.constant 0 : i32
    return %c0_i32, %c0_i32_0 : i32, i32
  }
  func.func @transform_3(%arg0: i32) -> (i32, i32) {
    %c0_i32 = arith.constant 0 : i32
    %c0_i32_0 = arith.constant 0 : i32
    %c0_i32_1 = arith.constant 0 : i32
    return %c0_i32, %c0_i32_0 : i32, i32
  }
  func.func @transform_4(%arg0: i32) -> (i32, i32) {
    %c0_i32 = arith.constant 0 : i32
    %c0_i32_0 = arith.constant 0 : i32
    return %arg0, %c0_i32 : i32, i32
  }
}

</mosaic_0001>

<llo_original>
// kernel: tpu_custom_call.1
$region0: #{tpu_custom_call.1}
  #allocation0 [shape = 'u32[]', space=smem, size = 0x4, offset = 0x4, fixed_abs, tag = 'smem constant byte address 0x4 - core index']
  #allocation1 [shape = 'u32[144,128]{1,0:T(1,128)}', space=vmem, size = 0x12000, scoped, tag = 'internal scratch']
  %s0 = inlined_call_operand.hbm [shape: bf16[16,16], index: 0, kind: input, shape index: {}]
  %s1 = inlined_call_operand.hbm [shape: bf16[16,128], index: 1, kind: input, shape index: {}]
  %s2 = inlined_call_operand.hbm [shape: bf16[256,128], index: 2, kind: input, shape index: {}]
  %s3 = inlined_call_operand.vmem [shape: f32[1,128], index: 3, kind: input, shape index: {}]
  %s4 = inlined_call_operand.hbm [shape: bf16[16,128], index: 4, kind: output, shape index: {}]
  %s5 = sld [smem:[#allocation0]]
  $region38: #{tpu_custom_call.1} parent=0
    _
  %s7 = ssub.s32 1, %s5
  %s8 = scalar_select 0, %s7, %s5
  $region1: #{tpu_custom_call.1} parent=0
    #allocation2 [shape = 'u8[4096]{0}', space=vmem, size = 0x1000, scoped, tag = 'input window, operand 0, single buffered']
    #allocation3 [shape = 's32[1]{0}', space=sflag, size = 0x4, scoped, tag = 'scoped memory for tpu_custom_call.1']
    #allocation4 [shape = 's32[1]{0}', space=sflag, size = 0x4, scoped, tag = 'scoped memory for tpu_custom_call.1']
    #allocation5 [shape = 'u8[4096]{0}', space=vmem, size = 0x1000, scoped, tag = 'input window, operand 1, single buffered']
    #allocation6 [shape = 's32[1]{0}', space=sflag, size = 0x4, scoped, tag = 'scoped memory for tpu_custom_call.1']
    #allocation7 [shape = 'u8[65536]{0}', space=vmem, size = 0x10000, scoped, tag = 'input window, operand 2, single buffered']
    #allocation8 [shape = 'u8[4096]{0}', space=vmem, size = 0x1000, scoped, tag = 'output window, operand 0, single buffered']
    %9 = vsyncpa [#allocation3], 0
    %10 = vsyncpa [#allocation6], 0
    %11 = vsyncpa [#allocation4], 0
    // Predicated region
    $region2: #{tpu_custom_call.1} parent=1 // pred_check
      _
    $region3: #{tpu_custom_call.1} parent=1 // pred_check_branch
      %13 = sbr.rel (0) target = $region5
    $region4: #{tpu_custom_call.1} parent=1 // pred_region
      %s15 = ssub.s32 128, 128
      %16 = vsyncadd [#allocation3], %s15
      %s17 = sshll.u32 [#allocation2], 4
      %s18 = int_to_ptr.vmem [resolvable:$true] %s17
      %23 = dma.hbm_to_vmem [thread:$0]  %s0, 128, %s18, [#allocation3], 64, 64, 4
    $region5: #{tpu_custom_call.1} parent=1 // pred_fallthru
      _
    // Predicated region
    $region6: #{tpu_custom_call.1} parent=1 // pred_check
      _
    $region7: #{tpu_custom_call.1} parent=1 // pred_check_branch
      %25 = sbr.rel (0) target = $region9
    $region8: #{tpu_custom_call.1} parent=1 // pred_region
      %s27 = ssub.s32 128, 128
      %28 = vsyncadd [#allocation6], %s27
      %s29 = sshll.u32 [#allocation5], 4
      %s30 = int_to_ptr.vmem [resolvable:$true] %s29
      %35 = dma.hbm_to_vmem [thread:$0]  %s1, 128, %s30, [#allocation6], 64, 64, 4
    $region9: #{tpu_custom_call.1} parent=1 // pred_fallthru
      _
    // Predicated region
    $region10: #{tpu_custom_call.1} parent=1 // pred_check
      _
    $region11: #{tpu_custom_call.1} parent=1 // pred_check_branch
      %37 = sbr.rel (0) target = $region13
    $region12: #{tpu_custom_call.1} parent=1 // pred_region
      %s39 = ssub.s32 2048, 2048
      %40 = vsyncadd [#allocation6], %s39
      %s41 = sshll.u32 [#allocation7], 4
      %s42 = int_to_ptr.vmem [resolvable:$true] %s41
      %47 = dma.hbm_to_vmem [thread:$0]  %s2, 2048, %s42, [#allocation6], 64, 64, 4
    $region13: #{tpu_custom_call.1} parent=1 // pred_fallthru
      _
    // Predicated region
    $region14: #{tpu_custom_call.1} parent=1 // pred_check
      _
    $region15: #{tpu_custom_call.1} parent=1 // pred_check_branch
      %49 = sbr.rel (0) target = $region17
    $region16: #{tpu_custom_call.1} parent=1 // pred_region
      _
    $region17: #{tpu_custom_call.1} parent=1 // pred_fallthru
      _
    // Predicated region
    $region18: #{tpu_custom_call.1} parent=1 // pred_check
      _
    $region19: #{tpu_custom_call.1} parent=1 // pred_check_branch
      %51 = sbr.rel (0) target = $region21
    $region20: #{tpu_custom_call.1} parent=1 // pred_region
      %52 = dma.done [#allocation3], 128
    $region21: #{tpu_custom_call.1} parent=1 // pred_fallthru
      _
    // Predicated region
    $region22: #{tpu_custom_call.1} parent=1 // pred_check
      _
    $region23: #{tpu_custom_call.1} parent=1 // pred_check_branch
      %54 = sbr.rel (0) target = $region25
    $region24: #{tpu_custom_call.1} parent=1 // pred_region
      %55 = dma.done [#allocation6], 128
    $region25: #{tpu_custom_call.1} parent=1 // pred_fallthru
      _
    // Predicated region
    $region26: #{tpu_custom_call.1} parent=1 // pred_check
      _
    $region27: #{tpu_custom_call.1} parent=1 // pred_check_branch
      %57 = sbr.rel (0) target = $region29
    $region28: #{tpu_custom_call.1} parent=1 // pred_region
      %58 = dma.done [#allocation6], 2048
    $region29: #{tpu_custom_call.1} parent=1 // pred_fallthru
      _
    %v60 = vld [vmem:[#allocation2] sm:$0xf]
    %v61 = vld [vmem:[#allocation2 + $0x4] sm:$0xf]
    %v62 = vld [vmem:[#allocation5] sm:$0xf]
    %v63 = vld [vmem:[#allocation5 + $0x4] sm:$0xf]
    %v66 = vunpack.c.l.b16 %v60
    %v67 = vunpack.c.l.b16 %v61
    %v68 = vpack.c.b16 %v67, %v66
    %v71 = vunpack.c.l.b16 %v62
    %v72 = vunpack.c.l.b16 %v63
    %v73 = vpack.c.b16 %v72, %v71
    %vm75 = vcmask 130048
    %v77 = vsel %vm75, %v68, 0
    %79 = vmatprep.subr.bf16.mxu0 0
    %80 = vmatpush1.bf16.msra.mxu0 %v73
    %81 = vmatprep.subr.bf16.mxu0 0
    %82 = vmatpush1.bf16.msra.mxu0 0
    %83 = vmatprep.subr.bf16.mxu0 0
    %84 = vmatpush1.bf16.msra.mxu0 0
    %85 = vmatprep.subr.bf16.mxu0 0
    %86 = vmatpush1.bf16.msra.mxu0 0
    %87 = vmatprep.subr.bf16.mxu0 0
    %88 = vmatpush1.bf16.msra.mxu0 0
    %89 = vmatprep.subr.bf16.mxu0 0
    %90 = vmatpush1.bf16.msra.mxu0 0
    %91 = vmatprep.subr.bf16.mxu0 0
    %92 = vmatpush1.bf16.msra.mxu0 0
    %93 = vmatprep.subr.bf16.mxu0 0
    %94 = vmatpush1.bf16.msra.mxu0 0
    %95 = vmatprep.subr.bf16.mxu0 0
    %96 = vmatpush1.bf16.msra.mxu0 0
    %97 = vmatprep.subr.bf16.mxu0 0
    %98 = vmatpush1.bf16.msra.mxu0 0
    %99 = vmatprep.subr.bf16.mxu0 0
    %100 = vmatpush1.bf16.msra.mxu0 0
    %101 = vmatprep.subr.bf16.mxu0 0
    %102 = vmatpush1.bf16.msra.mxu0 0
    %103 = vmatprep.subr.bf16.mxu0 0
    %104 = vmatpush1.bf16.msra.mxu0 0
    %105 = vmatprep.subr.bf16.mxu0 0
    %106 = vmatpush1.bf16.msra.mxu0 0
    %107 = vmatprep.subr.bf16.mxu0 0
    %108 = vmatpush1.bf16.msra.mxu0 0
    %109 = vmatprep.subr.bf16.mxu0 0
    %110 = vmatpush1.bf16.msra.mxu0 0
    %111 = vmatprep.mubr.bf16.mxu0 0
    %112 = vmatmul.mubr.bf16.gmra.mrb[0].mxu0 %v77
    %v113 = vpop.f32.mrb[0].mxu0
    %v114 = vadd.f32 0.0, %v113
    %v115 = vpop.f32.mrb[0].mxu0
    %v116 = vpop.f32.mrb[0].mxu0
    %v117 = vadd.f32 0.0, %v116
    %v118 = vpop.f32.mrb[0].mxu0
    %119 = vdwg.mxu0
    %s120 = smul.u32 0, 16
    %s121 = sshra.s32 %s120, 3
    %s122 = sand.u32 %s120, 7
    %s123 = smul.addr %s121, 4
    %s124 = scalar_lea.vmem [#allocation5], %s123
    %v125 = vld [vmem:[%s124] sm:$0xf]
    %v126 = vld [vmem:[%s124 + $0x4] sm:$0xf]
    %v127 = vpack.c.bf16 %v117, %v114
    %v130 = vunpack.c.l.b16 %v125
    %v131 = vunpack.c.l.b16 %v126
    %v132 = vpack.c.b16 %v131, %v130
    %v134 = vld [vmem:[#allocation7] sm:$0xf]
    %v135 = vld [vmem:[#allocation7 + $0x4] sm:$0xf]
    %v136 = vld [vmem:[#allocation7 + $0x8] sm:$0xf]
    %v137 = vld [vmem:[#allocation7 + $0xc] sm:$0xf]
    %v138 = vld [vmem:[#allocation7 + $0x10] sm:$0xf]
    %v139 = vld [vmem:[#allocation7 + $0x14] sm:$0xf]
    %v140 = vld [vmem:[#allocation7 + $0x18] sm:$0xf]
    %v141 = vld [vmem:[#allocation7 + $0x1c] sm:$0xf]
    %v142 = vld [vmem:[#allocation7 + $0x20] sm:$0xf]
    %v143 = vld [vmem:[#allocation7 + $0x24] sm:$0xf]
    %v144 = vld [vmem:[#allocation7 + $0x28] sm:$0xf]
    %v145 = vld [vmem:[#allocation7 + $0x2c] sm:$0xf]
    %v146 = vld [vmem:[#allocation7 + $0x30] sm:$0xf]
    %v147 = vld [vmem:[#allocation7 + $0x34] sm:$0xf]
    %v148 = vld [vmem:[#allocation7 + $0x38] sm:$0xf]
    %v149 = vld [vmem:[#allocation7 + $0x3c] sm:$0xf]
    %v150 = vld [vmem:[#allocation7 + $0x40] sm:$0xf]
    %v151 = vld [vmem:[#allocation7 + $0x44] sm:$0xf]
    %v152 = vld [vmem:[#allocation7 + $0x48] sm:$0xf]
    %v153 = vld [vmem:[#allocation7 + $0x4c] sm:$0xf]
    %v154 = vld [vmem:[#allocation7 + $0x50] sm:$0xf]
    %v155 = vld [vmem:[#allocation7 + $0x54] sm:$0xf]
    %v156 = vld [vmem:[#allocation7 + $0x58] sm:$0xf]
    %v157 = vld [vmem:[#allocation7 + $0x5c] sm:$0xf]
    %v158 = vld [vmem:[#allocation7 + $0x60] sm:$0xf]
    %v159 = vld [vmem:[#allocation7 + $0x64] sm:$0xf]
    %v160 = vld [vmem:[#allocation7 + $0x68] sm:$0xf]
    %v161 = vld [vmem:[#allocation7 + $0x6c] sm:$0xf]
    %v162 = vld [vmem:[#allocation7 + $0x70] sm:$0xf]
    %v163 = vld [vmem:[#allocation7 + $0x74] sm:$0xf]
    %v164 = vld [vmem:[#allocation7 + $0x78] sm:$0xf]
    %v165 = vld [vmem:[#allocation7 + $0x7c] sm:$0xf]
    %v166 = vld [vmem:[%s3] sm:$0x1]
    %v168 = vlaneseq
    %v169 = vshrl.u32 %v168, 7
    %v170 = vsub.s32 0, %v169
    %v171 = vrot.slane %v166, %v170
    %v205 = vunpack.c.l.b16 %v134
    %v206 = vunpack.c.l.b16 %v135
    %v207 = vunpack.c.l.b16 %v136
    %v208 = vunpack.c.l.b16 %v137
    %v209 = vunpack.c.l.b16 %v138
    %v210 = vunpack.c.l.b16 %v139
    %v211 = vunpack.c.l.b16 %v140
    %v212 = vunpack.c.l.b16 %v141
    %v213 = vunpack.c.l.b16 %v142
    %v214 = vunpack.c.l.b16 %v143
    %v215 = vunpack.c.l.b16 %v144
    %v216 = vunpack.c.l.b16 %v145
    %v217 = vunpack.c.l.b16 %v146
    %v218 = vunpack.c.l.b16 %v147
    %v219 = vunpack.c.l.b16 %v148
    %v220 = vunpack.c.l.b16 %v149
    %v221 = vunpack.c.l.b16 %v150
    %v222 = vunpack.c.l.b16 %v151
    %v223 = vunpack.c.l.b16 %v152
    %v224 = vunpack.c.l.b16 %v153
    %v225 = vunpack.c.l.b16 %v154
    %v226 = vunpack.c.l.b16 %v155
    %v227 = vunpack.c.l.b16 %v156
    %v228 = vunpack.c.l.b16 %v157
    %v229 = vunpack.c.l.b16 %v158
    %v230 = vunpack.c.l.b16 %v159
    %v231 = vunpack.c.l.b16 %v160
    %v232 = vunpack.c.l.b16 %v161
    %v233 = vunpack.c.l.b16 %v162
    %v234 = vunpack.c.l.b16 %v163
    %v235 = vunpack.c.l.b16 %v164
    %v236 = vunpack.c.l.b16 %v165
    %v237 = vpack.c.b16 %v206, %v205
    %v238 = vpack.c.b16 %v208, %v207
    %v239 = vpack.c.b16 %v210, %v209
    %v240 = vpack.c.b16 %v212, %v211
    %v241 = vpack.c.b16 %v214, %v213
    %v242 = vpack.c.b16 %v216, %v215
    %v243 = vpack.c.b16 %v218, %v217
    %v244 = vpack.c.b16 %v220, %v219
    %v245 = vpack.c.b16 %v222, %v221
    %v246 = vpack.c.b16 %v224, %v223
    %v247 = vpack.c.b16 %v226, %v225
    %v248 = vpack.c.b16 %v228, %v227
    %v249 = vpack.c.b16 %v230, %v229
    %v250 = vpack.c.b16 %v232, %v231
    %v251 = vpack.c.b16 %v234, %v233
    %v252 = vpack.c.b16 %v236, %v235
    %269 = vmatprep.subr.bf16.mxu0 0
    %270 = vmatpush1.bf16.msra.mxu0 %v237
    %271 = vmatprep.subr.bf16.mxu0 0
    %272 = vmatpush1.bf16.msra.mxu0 %v238
    %273 = vmatprep.subr.bf16.mxu0 0
    %274 = vmatpush1.bf16.msra.mxu0 %v239
    %275 = vmatprep.subr.bf16.mxu0 0
    %276 = vmatpush1.bf16.msra.mxu0 %v240
    %277 = vmatprep.subr.bf16.mxu0 0
    %278 = vmatpush1.bf16.msra.mxu0 %v241
    %279 = vmatprep.subr.bf16.mxu0 0
    %280 = vmatpush1.bf16.msra.mxu0 %v242
    %281 = vmatprep.subr.bf16.mxu0 0
    %282 = vmatpush1.bf16.msra.mxu0 %v243
    %283 = vmatprep.subr.bf16.mxu0 0
    %284 = vmatpush1.bf16.msra.mxu0 %v244
    %285 = vmatprep.subr.bf16.mxu0 0
    %286 = vmatpush1.bf16.msra.mxu0 %v245
    %287 = vmatprep.subr.bf16.mxu0 0
    %288 = vmatpush1.bf16.msra.mxu0 %v246
    %289 = vmatprep.subr.bf16.mxu0 0
    %290 = vmatpush1.bf16.msra.mxu0 %v247
    %291 = vmatprep.subr.bf16.mxu0 0
    %292 = vmatpush1.bf16.msra.mxu0 %v248
    %293 = vmatprep.subr.bf16.mxu0 0
    %294 = vmatpush1.bf16.msra.mxu0 %v249
    %295 = vmatprep.subr.bf16.mxu0 0
    %296 = vmatpush1.bf16.msra.mxu0 %v250
    %297 = vmatprep.subr.bf16.mxu0 0
    %298 = vmatpush1.bf16.msra.mxu0 %v251
    %299 = vmatprep.subr.bf16.mxu0 0
    %300 = vmatpush1.bf16.msra.mxu0 %v252
    %301 = vmatprep.mubr.bf16.mxu0 %v132
    %302 = vmatmul.mubr.bf16.gmra.mrb[0].mxu0 %v127
    %v303 = vpop.f32.mrb[0].mxu0
    %v304 = vadd.f32 %v171, %v303
    %v305 = vpop.f32.mrb[0].mxu0
    %v306 = vpop.f32.mrb[0].mxu0
    %v307 = vadd.f32 %v171, %v306
    %v308 = vpop.f32.mrb[0].mxu0
    %309 = vdwg.mxu0
    %v310 = vmax.f32 %v304, 0.0
    %v311 = vmax.f32 %v307, 0.0
    %v312 = vpack.c.bf16 %v311, %v310
    %v314 = vunpack.c.l.b16 %v312
    %v315 = vunpack.c.h.b16 %v312
    %v316 = vpack.c.b16 %v314, %v314
    %v317 = vpack.c.b16 %v315, %v315
    %320 = vst [vmem:[#allocation8] sm:$0xf] %v316
    %321 = vst [vmem:[#allocation8 + $0x4] sm:$0xf] %v317
    // Predicated region
    $region30: #{tpu_custom_call.1} parent=1 // pred_check
      _
    $region31: #{tpu_custom_call.1} parent=1 // pred_check_branch
      %323 = sbr.rel (0) target = $region33
    $region32: #{tpu_custom_call.1} parent=1 // pred_region
      %s325 = ssub.s32 128, 128
      %326 = vsyncadd [#allocation4], %s325
      %s327 = sshll.u32 [#allocation8], 4
      %s328 = int_to_ptr.vmem [resolvable:$true] %s327
      %333 = dma.vmem_to_hbm [thread:$0]  %s328, 128, %s4, [#allocation4], 64, 64, 4
    $region33: #{tpu_custom_call.1} parent=1 // pred_fallthru
      _
    // Predicated region
    $region34: #{tpu_custom_call.1} parent=1 // pred_check
      _
    $region35: #{tpu_custom_call.1} parent=1 // pred_check_branch
      %335 = sbr.rel (0) target = $region37
    $region36: #{tpu_custom_call.1} parent=1 // pred_region
      %336 = dma.done [#allocation4], 128
    $region37: #{tpu_custom_call.1} parent=1 // pred_fallthru
      _
    %337 = vsyncpa [#allocation3], 1
    %338 = vsyncpa [#allocation6], 1
    %339 = vsyncpa [#allocation4], 1

</llo_original>
